<compile_context>
chip_gen: v5e
topology: v5e:2x2
jax: 0.10.0
libtpu: 0.0.40
codegen_flags: <defaults>
</compile_context>

<pallas_src>
import math

import jax
import jax.numpy as jnp
from jax.experimental import pallas as pl
from jax.experimental.pallas import tpu as pltpu


def make_positional_encoding_table(d_model: int, max_len: int = 5000) -> jnp.ndarray:
    """Replicates the PyTorch buffer construction exactly (float32)."""
    assert d_model % 2 == 0, "PositionalEncoding requires an even d_model"
    position = jnp.arange(0, max_len, dtype=jnp.float32)[:, None]           # (max_len, 1)
    div_term = jnp.exp(
        jnp.arange(0, d_model, 2, dtype=jnp.float32) * (-math.log(10000.0) / d_model)
    )                                                                        # (d_model/2,)
    pe = jnp.zeros((max_len, d_model), dtype=jnp.float32)
    pe = pe.at[:, 0::2].set(jnp.sin(position * div_term))
    pe = pe.at[:, 1::2].set(jnp.cos(position * div_term))
    return pe                                                                # (max_len, d_model)


def _pos_enc_kernel(x_ref, pe_ref, o_ref):
    # x_ref / o_ref: (tb, tf) tile of the flattened input/output.
    # pe_ref:        (1, tf)  float32 tile of the flattened positional table.
    # Cast-before-add matches PyTorch's `x + pe.type(x.dtype)`; no-op for f32 x.
    # The (1, tf) -> (tb, tf) sublane broadcast is free on the VPU here.
    o_ref[...] = x_ref[...] + pe_ref[...].astype(o_ref.dtype)


_LANE = 128
_ROWGRP = 1024  # 8 sublanes x 128 lanes


def _pick_tf(flat: int, max_elems: int) -> int:
    """Largest flat-tile length <= max_elems; prefer 1024-multiples that divide flat evenly."""
    if flat <= max_elems:
        return flat
    max_units = max(1, max_elems // _ROWGRP)
    if flat % _ROWGRP == 0:
        units = flat // _ROWGRP
        best, d = 0, 1
        while d * d <= units:
            if units % d == 0:
                for c in (d, units // d):
                    if c <= max_units and c > best:
                        best = c
            d += 1
        # Only accept an evenly-dividing tile if it doesn't shrink tiles too much.
        if best >= max(1, max_units // 2):
            return best * _ROWGRP
    return max_units * _ROWGRP  # ragged tail; Pallas masks the partial last block.


def positional_encoding(
    x: jnp.ndarray,
    pe_table: jnp.ndarray,
    *,
    tile_bytes: int = 4 * 1024 * 1024,   # target bytes per x/out tile
    tiny_bytes: int = 512 * 1024,        # below this, use a single block (no pipeline overhead)
) -> jnp.ndarray:
    """x: (B, S, D). pe_table: (max_len, D) float32. Returns x + pe[:S] (dropout p=0)."""
    B, S, D = x.shape
    flat = S * D
    itemsize = x.dtype.itemsize

    # Lane-dense flattened layout (row-major reshape is free metadata).
    x2 = x.reshape(B, flat)
    # pe stays float32; the dtype cast happens in-kernel (no extra XLA cast op per call).
    pe2 = pe_table[:S, :].reshape(1, flat)

    total_bytes = B * flat * itemsize
    if total_bytes <= tiny_bytes:
        # Truly tiny problem: one block, one grid step.
        tb, tf = B, flat
    else:
        sub = max(8, 8 * (4 // itemsize))          # sublane-filling rows: 8 f32, 16 bf16
        tb = min(B, sub)
        max_tf = max(_ROWGRP, ((tile_bytes // itemsize) // tb) // _ROWGRP * _ROWGRP)
        tf = _pick_tf(flat, max_tf)
        # v7x has 2 TensorCores: make sure there are >= 2 grid steps to shard.
        if pl.cdiv(flat, tf) * pl.cdiv(B, tb) < 2 and flat >= 2048 and flat % (2 * _LANE) == 0:
            tf = flat // 2

    n_flat = pl.cdiv(flat, tf)
    n_batch = pl.cdiv(B, tb)
    grid = (n_flat, n_batch)  # batch innermost: pe tile is reused across the inner loop

    # pe only changes at outer flat-tile transitions; when the inner batch loop is
    # long, single-buffer it and give the saved VMEM back to the x/out tiles.
    pe_bufs = 1 if n_batch >= 4 else 2
    pe_spec_kwargs = {"pipeline_mode": pl.Buffered(1)} if pe_bufs == 1 else {}

    # Explicit VMEM budget: 2 x (x tile) + 2 x (out tile) + pe buffers, with headroom.
    footprint = 4 * tb * tf * itemsize + pe_bufs * tf * 4
    vmem_limit = int(min(max(footprint * 3 // 2 + (2 << 20), 16 << 20), 48 << 20))

    cost = pl.CostEstimate(
        flops=B * flat,
        transcendentals=0,
        bytes_accessed=2 * B * flat * itemsize + flat * 4,
    )

    out2 = pl.pallas_call(
        _pos_enc_kernel,
        out_shape=jax.ShapeDtypeStruct((B, flat), x.dtype),
        grid_spec=pltpu.PrefetchScalarGridSpec(
            num_scalar_prefetch=0,
            grid=grid,
            in_specs=[
                # x: one (tb, tf) tile per grid step.
                pl.BlockSpec((tb, tf), lambda f, b: (b, f)),
                # pe: block index depends only on the outer flat-tile index, so it
                # is not re-DMA'd across the inner batch loop.
                pl.BlockSpec((1, tf), lambda f, b: (0, f), **pe_spec_kwargs),
            ],
            out_specs=pl.BlockSpec((tb, tf), lambda f, b: (b, f)),
        ),
        compiler_params=pltpu.CompilerParams(
            dimension_semantics=("parallel", "parallel"),
            vmem_limit_bytes=vmem_limit,
        ),
        cost_estimate=cost,
    )(x2, pe2)

    return out2.reshape(B, S, D)


def _ref(x, pe_table):
    S = x.shape[1]
    return x + pe_table[None, :S, :].astype(x.dtype)


if __name__ == "__main__":
    max_len = 5000
    key = jax.random.PRNGKey(0)

    # ---- Test 1: tiny shape from the module's typical use (single-block path), f32.
    B, S, D = 2, 8, 32
    pe_small = make_positional_encoding_table(D, max_len)
    x = jax.random.normal(key, (B, S, D), dtype=jnp.float32)
    out = jax.block_until_ready(positional_encoding(x, pe_small))
    assert out.shape == x.shape and out.dtype == x.dtype
    assert jnp.allclose(out, _ref(x, pe_small), atol=1e-6, rtol=1e-6)

    # ---- Test 2: bf16 tiny shape (cast-before-add semantics, in-kernel cast).
    x_bf16 = x.astype(jnp.bfloat16)
    out_bf16 = jax.block_until_ready(positional_encoding(x_bf16, pe_small))
    assert out_bf16.dtype == jnp.bfloat16
    assert jnp.allclose(out_bf16.astype(jnp.float32),
                        _ref(x_bf16, pe_small).astype(jnp.float32), atol=1e-2, rtol=1e-2)

    # ---- Test 3: tiled path with tb=8, ragged batch tail (B=12), f32.
    B2, S2, D2 = 12, 128, 128
    pe_mid = make_positional_encoding_table(D2, max_len)
    x2 = jax.random.normal(jax.random.PRNGKey(1), (B2, S2, D2), dtype=jnp.float32)
    out2 = jax.block_until_ready(positional_encoding(x2, pe_mid))
    assert jnp.allclose(out2, _ref(x2, pe_mid), atol=1e-6, rtol=1e-6)

    # ---- Test 4: multi-flat-tile path with a ragged (non-dividing) flat tail, f32.
    B3, S3, D3 = 4, 40, 64   # flat = 2560, forced tile of 2048 -> ragged 512 tail
    pe_r = make_positional_encoding_table(D3, max_len)
    x3 = jax.random.normal(jax.random.PRNGKey(2), (B3, S3, D3), dtype=jnp.float32)
    out3 = jax.block_until_ready(
        positional_encoding(x3, pe_r, tile_bytes=32 * 1024, tiny_bytes=0))
    assert jnp.allclose(out3, _ref(x3, pe_r), atol=1e-6, rtol=1e-6)

    # ---- Test 5: bf16 tiled path with tb=16 and the 2-step (dual-TC) split branch.
    B4, S4, D4 = 16, 128, 128
    pe_b = make_positional_encoding_table(D4, max_len)
    x4 = jax.random.normal(jax.random.PRNGKey(3), (B4, S4, D4), dtype=jnp.bfloat16)
    out4 = jax.block_until_ready(positional_encoding(x4, pe_b, tiny_bytes=0))
    assert jnp.allclose(out4.astype(jnp.float32),
                        _ref(x4, pe_b).astype(jnp.float32), atol=1e-2, rtol=1e-2)

    print("KERNEL_OK")
</pallas_src>

<mosaic_0001>
module attributes {stable_mosaic.version = 11 : i64} {
  func.func @_pos_enc_kernel(%arg0: i32, %arg1: i32, %arg2: memref<2x256xf32, #tpu.memory_space<vmem>>, %arg3: memref<1x256xf32, #tpu.memory_space<vmem>>, %arg4: memref<2x256xf32, #tpu.memory_space<vmem>>) attributes {dimension_semantics = [#tpu.dimension_semantics<parallel>, #tpu.dimension_semantics<parallel>], iteration_bounds = array<i64: 1, 1>, scalar_prefetch = 0 : i64, scratch_operands = 0 : i64, tpu.core_type = #tpu.core_type<tc>, window_params = [{transform_indices = @transform_0, window_bounds = array<i64: 2, 256>}, {transform_indices = @transform_1, window_bounds = array<i64: 1, 256>}, {transform_indices = @transform_2, window_bounds = array<i64: 2, 256>}]} {
    %c0 = arith.constant 0 : index
    %c0_0 = arith.constant 0 : index
    %0 = vector.load %arg2[%c0, %c0_0] : memref<2x256xf32, #tpu.memory_space<vmem>>, vector<2x256xf32>
    %c0_1 = arith.constant 0 : index
    %c0_2 = arith.constant 0 : index
    %1 = vector.load %arg3[%c0_1, %c0_2] : memref<1x256xf32, #tpu.memory_space<vmem>>, vector<1x256xf32>
    %2 = vector.broadcast %1 : vector<1x256xf32> to vector<2x256xf32>
    %3 = arith.addf %0, %2 : vector<2x256xf32>
    %c0_3 = arith.constant 0 : index
    %c0_4 = arith.constant 0 : index
    %4 = vector.load %arg4[%c0_3, %c0_4] : memref<2x256xf32, #tpu.memory_space<vmem>>, vector<2x256xf32>
    tpu.vector_store %arg4[%c0_3, %c0_4], %3 {strides = array<i32>} : memref<2x256xf32, #tpu.memory_space<vmem>>, vector<2x256xf32>,
    return
  }
  func.func @transform_0(%arg0: i32, %arg1: i32) -> (i32, i32) {
    %c0_i32 = arith.constant 0 : i32
    return %arg1, %arg0 : i32, i32
  }
  func.func @transform_1(%arg0: i32, %arg1: i32) -> (i32, i32) {
    %c0_i32 = arith.constant 0 : i32
    %c0_i32_0 = arith.constant 0 : i32
    return %c0_i32, %arg0 : i32, i32
  }
  func.func @transform_2(%arg0: i32, %arg1: i32) -> (i32, i32) {
    %c0_i32 = arith.constant 0 : i32
    return %arg1, %arg0 : i32, i32
  }
}

</mosaic_0001>

<llo_original>
// kernel: tpu_custom_call.1
$region0: #{tpu_custom_call.1}
  #allocation0 [shape = 'u32[]', space=smem, size = 0x4, offset = 0x4, fixed_abs, tag = 'smem constant byte address 0x4 - core index']
  #allocation1 [shape = 'u32[72,128]{1,0:T(1,128)}', space=vmem, size = 0x9000, scoped, tag = 'internal scratch']
  %s0 = inlined_call_operand.hbm [shape: f32[2,256], index: 0, kind: input, shape index: {}]
  %s1 = inlined_call_operand.hbm [shape: f32[1,256], index: 1, kind: input, shape index: {}]
  %s2 = inlined_call_operand.hbm [shape: f32[2,256], index: 2, kind: output, shape index: {}]
  %s3 = sld [smem:[#allocation0]]
  $region26: #{tpu_custom_call.1} parent=0
    _
  %s5 = ssub.s32 1, %s3
  %s6 = scalar_select 0, %s5, %s3
  $region1: #{tpu_custom_call.1} parent=0
    #allocation2 [shape = 'u8[2048]{0}', space=vmem, size = 0x800, scoped, tag = 'input window, operand 0, single buffered']
    #allocation3 [shape = 's32[1]{0}', space=sflag, size = 0x4, scoped, tag = 'scoped memory for tpu_custom_call.1']
    #allocation4 [shape = 's32[1]{0}', space=sflag, size = 0x4, scoped, tag = 'scoped memory for tpu_custom_call.1']
    #allocation5 [shape = 'u8[1024]{0}', space=vmem, size = 0x400, scoped, tag = 'input window, operand 1, single buffered']
    #allocation6 [shape = 's32[1]{0}', space=sflag, size = 0x4, scoped, tag = 'scoped memory for tpu_custom_call.1']
    #allocation7 [shape = 'u8[2048]{0}', space=vmem, size = 0x800, scoped, tag = 'output window, operand 0, single buffered']
    %7 = vsyncpa [#allocation3], 0
    %8 = vsyncpa [#allocation6], 0
    %9 = vsyncpa [#allocation4], 0
    // Predicated region
    $region2: #{tpu_custom_call.1} parent=1 // pred_check
      _
    $region3: #{tpu_custom_call.1} parent=1 // pred_check_branch
      %11 = sbr.rel (0) target = $region5
    $region4: #{tpu_custom_call.1} parent=1 // pred_region
      %13 = vsyncadd [#allocation3], 0
      %s15 = sshll.u32 %s0, 4
      %s16 = int_to_ptr.hbm [resolvable:$true] %s15
      %s17 = sshll.u32 [#allocation2], 4
      %s18 = int_to_ptr.vmem [resolvable:$true] %s17
      %20 = dma.hbm_to_vmem [thread:$0]  %s16, 64, %s18, [#allocation3]
    $region5: #{tpu_custom_call.1} parent=1 // pred_fallthru
      _
    // Predicated region
    $region6: #{tpu_custom_call.1} parent=1 // pred_check
      _
    $region7: #{tpu_custom_call.1} parent=1 // pred_check_branch
      %22 = sbr.rel (0) target = $region9
    $region8: #{tpu_custom_call.1} parent=1 // pred_region
      %24 = vsyncadd [#allocation6], 0
      %s26 = sshll.u32 %s1, 4
      %s27 = int_to_ptr.hbm [resolvable:$true] %s26
      %s28 = sshll.u32 [#allocation5], 4
      %s29 = int_to_ptr.vmem [resolvable:$true] %s28
      %31 = dma.hbm_to_vmem [thread:$0]  %s27, 32, %s29, [#allocation6]
    $region9: #{tpu_custom_call.1} parent=1 // pred_fallthru
      _
    // Predicated region
    $region10: #{tpu_custom_call.1} parent=1 // pred_check
      _
    $region11: #{tpu_custom_call.1} parent=1 // pred_check_branch
      %33 = sbr.rel (0) target = $region13
    $region12: #{tpu_custom_call.1} parent=1 // pred_region
      %35 = dma.done [#allocation3], 64
    $region13: #{tpu_custom_call.1} parent=1 // pred_fallthru
      _
    // Predicated region
    $region14: #{tpu_custom_call.1} parent=1 // pred_check
      _
    $region15: #{tpu_custom_call.1} parent=1 // pred_check_branch
      %37 = sbr.rel (0) target = $region17
    $region16: #{tpu_custom_call.1} parent=1 // pred_region
      %39 = dma.done [#allocation6], 32
    $region17: #{tpu_custom_call.1} parent=1 // pred_fallthru
      _
    %v40 = vld [vmem:[#allocation2] sm:$0xf]
    %v41 = vld [vmem:[#allocation5] sm:$0x3]
    %v43 = vperm.slane %v41, 0
    %v44 = vperm.slane %v41, 1
    %v45 = vrot.slane %v44, 6
    %vm46 = vcmask 1041408
    %v47 = vsel %vm46, %v43, %v45
    %v49 = vadd.f32 %v40, %v47
    %50 = vst [vmem:[#allocation7] sm:$0xf] %v49
    // Predicated region
    $region18: #{tpu_custom_call.1} parent=1 // pred_check
      _
    $region19: #{tpu_custom_call.1} parent=1 // pred_check_branch
      %52 = sbr.rel (0) target = $region21
    $region20: #{tpu_custom_call.1} parent=1 // pred_region
      %54 = vsyncadd [#allocation4], 0
      %s56 = sshll.u32 [#allocation7], 4
      %s57 = int_to_ptr.vmem [resolvable:$true] %s56
      %s58 = sshll.u32 %s2, 4
      %s59 = int_to_ptr.hbm [resolvable:$true] %s58
      %61 = dma.vmem_to_hbm [thread:$0]  %s57, 64, %s59, [#allocation4]
    $region21: #{tpu_custom_call.1} parent=1 // pred_fallthru
      _
    // Predicated region
    $region22: #{tpu_custom_call.1} parent=1 // pred_check
      _
    $region23: #{tpu_custom_call.1} parent=1 // pred_check_branch
      %63 = sbr.rel (0) target = $region25
    $region24: #{tpu_custom_call.1} parent=1 // pred_region
      %65 = dma.done [#allocation4], 64
    $region25: #{tpu_custom_call.1} parent=1 // pred_fallthru
      _
    %66 = vsyncpa [#allocation3], 1
    %67 = vsyncpa [#allocation6], 1
    %68 = vsyncpa [#allocation4], 1

</llo_original>
